<compile_context>
chip_gen: v6e
topology: v6e:2x2x1
jax: 0.10.0
libtpu: 0.0.40
codegen_flags: <defaults>
</compile_context>

<pallas_src>
import jax
import jax.numpy as jnp
from jax.experimental import pallas as pl
from jax.experimental.pallas import tpu as pltpu

H1 = 256        # first hidden width
H2 = 512        # second hidden width
L2_CHUNK = 256  # layer-2 column chunk (caps live f32 intermediate at (bt, 256))
A_PAD = 128     # lane-dense padded output width


def critic_kernel(xs_ref, us_ref, w1s_ref, w1u_ref, b1_ref,
                  w2_ref, b2_ref, w3_ref, b3_ref, out_ref):
    # Activations cast to bf16 (MXU-native input width); accumulate in f32.
    xs = xs_ref[...].astype(jnp.bfloat16)
    us = us_ref[...].astype(jnp.bfloat16)

    # Layer 1: torch.cat folded into a split matmul (xs-part + us-part).
    # TODO(synk): optionally fuse into a single K=32 matmul via a small VMEM
    # staging buffer once the MXU slot becomes binding (not currently).
    h1 = (jnp.dot(xs, w1s_ref[...], preferred_element_type=jnp.float32)
          + jnp.dot(us, w1u_ref[...], preferred_element_type=jnp.float32)
          + b1_ref[...])
    h1 = jnp.maximum(h1, 0.0).astype(jnp.bfloat16)

    # Layers 2 + 3 fused, chunked over the 512-wide hidden dim. Each 256-column
    # piece of h2 is produced, relu'd, cast to bf16, and immediately contracted
    # into the layer-3 f32 accumulator, so no (bt, 512) f32 tensor is ever live.
    bt = out_ref.shape[0]
    acc = jnp.zeros((bt, A_PAD), jnp.float32)
    for lo in range(0, H2, L2_CHUNK):
        h2c = (jnp.dot(h1, w2_ref[:, lo:lo + L2_CHUNK],
                       preferred_element_type=jnp.float32)
               + b2_ref[:, lo:lo + L2_CHUNK])
        h2c = jnp.maximum(h2c, 0.0).astype(jnp.bfloat16)
        acc = acc + jnp.dot(h2c, w3_ref[lo:lo + L2_CHUNK, :],
                            preferred_element_type=jnp.float32)

    # Lane-dense bf16 writeback (full 128-lane unmasked stores, half the bytes).
    out_ref[...] = (acc + b3_ref[...]).astype(out_ref.dtype)


def _choose_batch_tile(B):
    """Pick the batch tile per the review: big tiles, >=2 steps once B>=256,
    prefer exact divisors of B so the wrapper pad is skipped."""
    if B < 128:
        # Single padded tile; >=16 sublanes keeps bf16 operands in full vregs.
        return max(16, ((B + 15) // 16) * 16)
    if B < 256:
        return 128
    # Exact divisor with >= 2 grid steps (no pad, both v7x TCs engaged).
    for cand in (512, 256, 128):
        if B % cand == 0 and B // cand >= 2:
            return cand
    # No exact divisor: biggest tile that still yields >= 2 steps after padding.
    for cand in (512, 256, 128):
        if -(-B // cand) >= 2:
            return cand
    return 128


def critic_forward(xs, us, kernel_params, action_num):
    """xs: (B, states_num) f32, us: (B, actions_num) f32 -> (B, action_num) f32."""
    w1s, w1u, b1, w2, b2, w3p, b3p = kernel_params
    B, S = xs.shape
    U = us.shape[1]

    bt = _choose_batch_tile(B)
    B_pad = ((B + bt - 1) // bt) * bt
    if B_pad != B:
        pad = B_pad - B
        xs = jnp.pad(xs, ((0, pad), (0, 0)))
        us = jnp.pad(us, ((0, pad), (0, 0)))

    grid = (B_pad // bt,)

    def row_spec(cols):
        return pl.BlockSpec((bt, cols), lambda i: (i, 0))

    def resident(arr):
        # Full-array block, constant index -> DMA'd once, stays in VMEM.
        # Single-buffered: double-buffering a constant block only wastes VMEM.
        return pl.BlockSpec(arr.shape, lambda i: (0, 0),
                            pipeline_mode=pl.Buffered(1))

    out = pl.pallas_call(
        critic_kernel,
        out_shape=jax.ShapeDtypeStruct((B_pad, A_PAD), jnp.bfloat16),
        grid=grid,
        in_specs=[row_spec(S), row_spec(U),
                  resident(w1s), resident(w1u), resident(b1),
                  resident(w2), resident(b2),
                  resident(w3p), resident(b3p)],
        out_specs=pl.BlockSpec((bt, A_PAD), lambda i: (i, 0)),
        compiler_params=pltpu.CompilerParams(
            dimension_semantics=("parallel",)),
    )(xs, us, w1s, w1u, b1, w2, b2, w3p, b3p)

    return out[:B, :action_num].astype(jnp.float32)


def init_params(key, states_num, actions_num, action_num):
    """PyTorch-Linear-style init (uniform +-1/sqrt(fan_in)).

    Returns (kernel_params, f32_reference_params).
    kernel_params layout: w1 split at the xs/us boundary, weights in bf16,
    layer-3 weight/bias zero-padded to A_PAD output columns.
    """
    d_in = states_num + actions_num
    dims = [(d_in, H1), (H1, H2), (H2, action_num)]
    raw = []
    for fan_in, fan_out in dims:
        key, kw, kb = jax.random.split(key, 3)
        bound = 1.0 / (float(fan_in) ** 0.5)
        w = jax.random.uniform(kw, (fan_in, fan_out), jnp.float32, -bound, bound)
        b = jax.random.uniform(kb, (1, fan_out), jnp.float32, -bound, bound)
        raw.append((w, b))
    (w1, b1), (w2, b2), (w3, b3) = raw

    w1s = w1[:states_num].astype(jnp.bfloat16)
    w1u = w1[states_num:].astype(jnp.bfloat16)
    w2b = w2.astype(jnp.bfloat16)
    w3p = jnp.zeros((H2, A_PAD), jnp.bfloat16).at[:, :action_num].set(
        w3.astype(jnp.bfloat16))
    b3p = jnp.zeros((1, A_PAD), jnp.float32).at[:, :action_num].set(b3)

    kernel_params = (w1s, w1u, b1, w2b, b2, w3p, b3p)
    f32_params = (w1, b1, w2, b2, w3, b3)
    return kernel_params, f32_params


def _bf16_reference(xs, us, kparams, action_num):
    """Pure-JAX reference that mirrors the kernel math (bf16 operands, f32 acc,
    bf16 inter-layer casts, bf16 output rounding)."""
    w1s, w1u, b1, w2b, b2, w3p, b3p = kparams
    xb = xs.astype(jnp.bfloat16)
    ub = us.astype(jnp.bfloat16)
    h1 = jnp.maximum(jnp.dot(xb, w1s, preferred_element_type=jnp.float32)
                     + jnp.dot(ub, w1u, preferred_element_type=jnp.float32)
                     + b1, 0.0).astype(jnp.bfloat16)
    h2 = jnp.maximum(jnp.dot(h1, w2b, preferred_element_type=jnp.float32)
                     + b2, 0.0).astype(jnp.bfloat16)
    val = jnp.dot(h2, w3p, preferred_element_type=jnp.float32) + b3p
    return val.astype(jnp.bfloat16).astype(jnp.float32)[:, :action_num]


if __name__ == "__main__":
    # Small MADDPG-style shapes: per-agent state dim 24, joint action dim 8,
    # critic output dim (action_num) 4, batch 8.
    states_num, actions_num, action_num = 24, 8, 4
    batch = 8

    key = jax.random.PRNGKey(0)
    key, kxs, kus = jax.random.split(key, 3)
    xs = jax.random.normal(kxs, (batch, states_num), jnp.float32)
    us = jax.random.normal(kus, (batch, actions_num), jnp.float32)

    kparams, fparams = init_params(key, states_num, actions_num, action_num)

    value = critic_forward(xs, us, kparams, action_num)
    value = jax.block_until_ready(value)
    assert value.shape == (batch, action_num)

    # Kernel-exact (bf16-emulating) reference; 1e-2 tolerance absorbs bf16 ulps.
    ref_bf16 = _bf16_reference(xs, us, kparams, action_num)
    assert jnp.allclose(value, ref_bf16, atol=1e-2, rtol=1e-2)

    # Loose check against the original full-f32 PyTorch math (bf16 weight /
    # activation / output quantization loosens the tolerance).
    w1, b1f, w2, b2f, w3, b3f = fparams
    x = jnp.concatenate([xs, us], axis=1)
    r1 = jnp.maximum(x @ w1 + b1f, 0.0)
    r2 = jnp.maximum(r1 @ w2 + b2f, 0.0)
    ref_f32 = r2 @ w3 + b3f
    assert jnp.allclose(value, ref_f32, atol=5e-2, rtol=5e-2)

    # Exercise the large-batch tiling path (divisor -> no pad, multi-step grid).
    key, kxl, kul = jax.random.split(key, 3)
    xs_l = jax.random.normal(kxl, (512, states_num), jnp.float32)
    us_l = jax.random.normal(kul, (512, actions_num), jnp.float32)
    val_l = jax.block_until_ready(critic_forward(xs_l, us_l, kparams, action_num))
    assert val_l.shape == (512, action_num)
    assert jnp.allclose(val_l, _bf16_reference(xs_l, us_l, kparams, action_num),
                        atol=1e-2, rtol=1e-2)

    print("KERNEL_OK")
</pallas_src>

<mosaic_0001>
module attributes {stable_mosaic.version = 11 : i64} {
  func.func @critic_kernel(%arg0: i32, %arg1: memref<16x24xf32, #tpu.memory_space<vmem>>, %arg2: memref<16x8xf32, #tpu.memory_space<vmem>>, %arg3: memref<24x256xbf16, #tpu.memory_space<vmem>>, %arg4: memref<8x256xbf16, #tpu.memory_space<vmem>>, %arg5: memref<1x256xf32, #tpu.memory_space<vmem>>, %arg6: memref<256x512xbf16, #tpu.memory_space<vmem>>, %arg7: memref<1x512xf32, #tpu.memory_space<vmem>>, %arg8: memref<512x128xbf16, #tpu.memory_space<vmem>>, %arg9: memref<1x128xf32, #tpu.memory_space<vmem>>, %arg10: memref<16x128xbf16, #tpu.memory_space<vmem>>) attributes {dimension_semantics = [#tpu.dimension_semantics<parallel>], iteration_bounds = array<i64: 1>, scalar_prefetch = 0 : i64, scratch_operands = 0 : i64, tpu.core_type = #tpu.core_type<tc>, window_params = [{transform_indices = @transform_0, window_bounds = array<i64: 16, 24>}, {transform_indices = @transform_1, window_bounds = array<i64: 16, 8>}, {pipeline_mode = #tpu.pipeline_mode<synchronous>, transform_indices = @transform_2, window_bounds = array<i64: 24, 256>}, {pipeline_mode = #tpu.pipeline_mode<synchronous>, transform_indices = @transform_3, window_bounds = array<i64: 8, 256>}, {pipeline_mode = #tpu.pipeline_mode<synchronous>, transform_indices = @transform_4, window_bounds = array<i64: 1, 256>}, {pipeline_mode = #tpu.pipeline_mode<synchronous>, transform_indices = @transform_5, window_bounds = array<i64: 256, 512>}, {pipeline_mode = #tpu.pipeline_mode<synchronous>, transform_indices = @transform_6, window_bounds = array<i64: 1, 512>}, {pipeline_mode = #tpu.pipeline_mode<synchronous>, transform_indices = @transform_7, window_bounds = array<i64: 512, 128>}, {pipeline_mode = #tpu.pipeline_mode<synchronous>, transform_indices = @transform_8, window_bounds = array<i64: 1, 128>}, {transform_indices = @transform_9, window_bounds = array<i64: 16, 128>}]} {
    %c0 = arith.constant 0 : index
    %c0_0 = arith.constant 0 : index
    %0 = vector.load %arg1[%c0, %c0_0] : memref<16x24xf32, #tpu.memory_space<vmem>>, vector<16x24xf32>
    %1 = arith.truncf %0 : vector<16x24xf32> to vector<16x24xbf16>
    %c0_1 = arith.constant 0 : index
    %c0_2 = arith.constant 0 : index
    %2 = vector.load %arg2[%c0_1, %c0_2] : memref<16x8xf32, #tpu.memory_space<vmem>>, vector<16x8xf32>
    %3 = arith.truncf %2 : vector<16x8xf32> to vector<16x8xbf16>
    %c0_3 = arith.constant 0 : index
    %c0_4 = arith.constant 0 : index
    %4 = vector.load %arg3[%c0_3, %c0_4] : memref<24x256xbf16, #tpu.memory_space<vmem>>, vector<24x256xbf16>
    %cst = arith.constant dense<0.000000e+00> : vector<16x256xf32>
    %5 = tpu.matmul %1, %4, %cst {dimension_numbers = #tpu.dot_dimension_numbers<[1], [0], [0], [1], [0, 0, 1, 1], [], []>} : vector<16x24xbf16>, vector<24x256xbf16>, vector<16x256xf32> -> vector<16x256xf32>
    %c0_5 = arith.constant 0 : index
    %c0_6 = arith.constant 0 : index
    %6 = vector.load %arg4[%c0_5, %c0_6] : memref<8x256xbf16, #tpu.memory_space<vmem>>, vector<8x256xbf16>
    %cst_7 = arith.constant dense<0.000000e+00> : vector<16x256xf32>
    %7 = tpu.matmul %3, %6, %cst_7 {dimension_numbers = #tpu.dot_dimension_numbers<[1], [0], [0], [1], [0, 0, 1, 1], [], []>} : vector<16x8xbf16>, vector<8x256xbf16>, vector<16x256xf32> -> vector<16x256xf32>
    %8 = arith.addf %5, %7 : vector<16x256xf32>
    %c0_8 = arith.constant 0 : index
    %c0_9 = arith.constant 0 : index
    %9 = vector.load %arg5[%c0_8, %c0_9] : memref<1x256xf32, #tpu.memory_space<vmem>>, vector<1x256xf32>
    %10 = vector.broadcast %9 : vector<1x256xf32> to vector<16x256xf32>
    %11 = arith.addf %8, %10 : vector<16x256xf32>
    %cst_10 = arith.constant 0.000000e+00 : f32
    %12 = vector.broadcast %cst_10 : f32 to vector<16x256xf32>
    %13 = arith.maximumf %11, %12 : vector<16x256xf32>
    %14 = arith.truncf %13 : vector<16x256xf32> to vector<16x256xbf16>
    %cst_11 = arith.constant 0.000000e+00 : f32
    %15 = vector.broadcast %cst_11 : f32 to vector<16x128xf32>
    %c0_12 = arith.constant 0 : index
    %c0_13 = arith.constant 0 : index
    %16 = vector.load %arg6[%c0_12, %c0_13] : memref<256x512xbf16, #tpu.memory_space<vmem>>, vector<256x256xbf16>
    %cst_14 = arith.constant dense<0.000000e+00> : vector<16x256xf32>
    %17 = tpu.matmul %14, %16, %cst_14 {dimension_numbers = #tpu.dot_dimension_numbers<[1], [0], [0], [1], [0, 0, 1, 1], [], []>} : vector<16x256xbf16>, vector<256x256xbf16>, vector<16x256xf32> -> vector<16x256xf32>
    %c0_15 = arith.constant 0 : index
    %c0_16 = arith.constant 0 : index
    %18 = vector.load %arg7[%c0_15, %c0_16] : memref<1x512xf32, #tpu.memory_space<vmem>>, vector<1x256xf32>
    %19 = vector.broadcast %18 : vector<1x256xf32> to vector<16x256xf32>
    %20 = arith.addf %17, %19 : vector<16x256xf32>
    %cst_17 = arith.constant 0.000000e+00 : f32
    %21 = vector.broadcast %cst_17 : f32 to vector<16x256xf32>
    %22 = arith.maximumf %20, %21 : vector<16x256xf32>
    %23 = arith.truncf %22 : vector<16x256xf32> to vector<16x256xbf16>
    %c0_18 = arith.constant 0 : index
    %c0_19 = arith.constant 0 : index
    %24 = vector.load %arg8[%c0_18, %c0_19] : memref<512x128xbf16, #tpu.memory_space<vmem>>, vector<256x128xbf16>
    %cst_20 = arith.constant dense<0.000000e+00> : vector<16x128xf32>
    %25 = tpu.matmul %23, %24, %cst_20 {dimension_numbers = #tpu.dot_dimension_numbers<[1], [0], [0], [1], [0, 0, 1, 1], [], []>} : vector<16x256xbf16>, vector<256x128xbf16>, vector<16x128xf32> -> vector<16x128xf32>
    %26 = arith.addf %15, %25 : vector<16x128xf32>
    %c0_21 = arith.constant 0 : index
    %c256 = arith.constant 256 : index
    %27 = vector.load %arg6[%c0_21, %c256] : memref<256x512xbf16, #tpu.memory_space<vmem>>, vector<256x256xbf16>
    %cst_22 = arith.constant dense<0.000000e+00> : vector<16x256xf32>
    %28 = tpu.matmul %14, %27, %cst_22 {dimension_numbers = #tpu.dot_dimension_numbers<[1], [0], [0], [1], [0, 0, 1, 1], [], []>} : vector<16x256xbf16>, vector<256x256xbf16>, vector<16x256xf32> -> vector<16x256xf32>
    %c0_23 = arith.constant 0 : index
    %c256_24 = arith.constant 256 : index
    %29 = vector.load %arg7[%c0_23, %c256_24] : memref<1x512xf32, #tpu.memory_space<vmem>>, vector<1x256xf32>
    %30 = vector.broadcast %29 : vector<1x256xf32> to vector<16x256xf32>
    %31 = arith.addf %28, %30 : vector<16x256xf32>
    %cst_25 = arith.constant 0.000000e+00 : f32
    %32 = vector.broadcast %cst_25 : f32 to vector<16x256xf32>
    %33 = arith.maximumf %31, %32 : vector<16x256xf32>
    %34 = arith.truncf %33 : vector<16x256xf32> to vector<16x256xbf16>
    %c256_26 = arith.constant 256 : index
    %c0_27 = arith.constant 0 : index
    %35 = vector.load %arg8[%c256_26, %c0_27] : memref<512x128xbf16, #tpu.memory_space<vmem>>, vector<256x128xbf16>
    %cst_28 = arith.constant dense<0.000000e+00> : vector<16x128xf32>
    %36 = tpu.matmul %34, %35, %cst_28 {dimension_numbers = #tpu.dot_dimension_numbers<[1], [0], [0], [1], [0, 0, 1, 1], [], []>} : vector<16x256xbf16>, vector<256x128xbf16>, vector<16x128xf32> -> vector<16x128xf32>
    %37 = arith.addf %26, %36 : vector<16x128xf32>
    %c0_29 = arith.constant 0 : index
    %c0_30 = arith.constant 0 : index
    %38 = vector.load %arg9[%c0_29, %c0_30] : memref<1x128xf32, #tpu.memory_space<vmem>>, vector<1x128xf32>
    %39 = vector.broadcast %38 : vector<1x128xf32> to vector<16x128xf32>
    %40 = arith.addf %37, %39 : vector<16x128xf32>
    %41 = arith.truncf %40 : vector<16x128xf32> to vector<16x128xbf16>
    %c0_31 = arith.constant 0 : index
    %c0_32 = arith.constant 0 : index
    %42 = vector.load %arg10[%c0_31, %c0_32] : memref<16x128xbf16, #tpu.memory_space<vmem>>, vector<16x128xbf16>
    tpu.vector_store %arg10[%c0_31, %c0_32], %41 {strides = array<i32>} : memref<16x128xbf16, #tpu.memory_space<vmem>>, vector<16x128xbf16>,
    return
  }
  func.func @transform_0(%arg0: i32) -> (i32, i32) {
    %c0_i32 = arith.constant 0 : i32
    %c0_i32_0 = arith.constant 0 : i32
    return %arg0, %c0_i32 : i32, i32
  }
  func.func @transform_1(%arg0: i32) -> (i32, i32) {
    %c0_i32 = arith.constant 0 : i32
    %c0_i32_0 = arith.constant 0 : i32
    return %arg0, %c0_i32 : i32, i32
  }
  func.func @transform_2(%arg0: i32) -> (i32, i32) {
    %c0_i32 = arith.constant 0 : i32
    %c0_i32_0 = arith.constant 0 : i32
    %c0_i32_1 = arith.constant 0 : i32
    return %c0_i32, %c0_i32_0 : i32, i32
  }
  func.func @transform_3(%arg0: i32) -> (i32, i32) {
    %c0_i32 = arith.constant 0 : i32
    %c0_i32_0 = arith.constant 0 : i32
    %c0_i32_1 = arith.constant 0 : i32
    return %c0_i32, %c0_i32_0 : i32, i32
  }
  func.func @transform_4(%arg0: i32) -> (i32, i32) {
    %c0_i32 = arith.constant 0 : i32
    %c0_i32_0 = arith.constant 0 : i32
    %c0_i32_1 = arith.constant 0 : i32
    return %c0_i32, %c0_i32_0 : i32, i32
  }
  func.func @transform_5(%arg0: i32) -> (i32, i32) {
    %c0_i32 = arith.constant 0 : i32
    %c0_i32_0 = arith.constant 0 : i32
    %c0_i32_1 = arith.constant 0 : i32
    return %c0_i32, %c0_i32_0 : i32, i32
  }
  func.func @transform_6(%arg0: i32) -> (i32, i32) {
    %c0_i32 = arith.constant 0 : i32
    %c0_i32_0 = arith.constant 0 : i32
    %c0_i32_1 = arith.constant 0 : i32
    return %c0_i32, %c0_i32_0 : i32, i32
  }
  func.func @transform_7(%arg0: i32) -> (i32, i32) {
    %c0_i32 = arith.constant 0 : i32
    %c0_i32_0 = arith.constant 0 : i32
    %c0_i32_1 = arith.constant 0 : i32
    return %c0_i32, %c0_i32_0 : i32, i32
  }
  func.func @transform_8(%arg0: i32) -> (i32, i32) {
    %c0_i32 = arith.constant 0 : i32
    %c0_i32_0 = arith.constant 0 : i32
    %c0_i32_1 = arith.constant 0 : i32
    return %c0_i32, %c0_i32_0 : i32, i32
  }
  func.func @transform_9(%arg0: i32) -> (i32, i32) {
    %c0_i32 = arith.constant 0 : i32
    %c0_i32_0 = arith.constant 0 : i32
    return %arg0, %c0_i32 : i32, i32
  }
}

</mosaic_0001>

<llo_original>
// kernel: tpu_custom_call.1
$region0: #{tpu_custom_call.1}
  #allocation0 [shape = 'u32[]', space=smem, size = 0x4, offset = 0x4, fixed_abs, tag = 'smem constant byte address 0x4 - core index']
  #allocation1 [shape = 'u32[144,128]{1,0:T(1,128)}', space=vmem, size = 0x12000, scoped, tag = 'internal scratch']
  %s0 = inlined_call_operand.hbm [shape: f32[16,24], index: 0, kind: input, shape index: {}]
  %s1 = inlined_call_operand.vmem [shape: f32[16,8], index: 1, kind: input, shape index: {}]
  %s2 = inlined_call_operand.vmem [shape: bf16[24,256], index: 2, kind: input, shape index: {}]
  %s3 = inlined_call_operand.hbm [shape: bf16[8,256], index: 3, kind: input, shape index: {}]
  %s4 = inlined_call_operand.vmem [shape: f32[1,256], index: 4, kind: input, shape index: {}]
  %s5 = inlined_call_operand.hbm [shape: bf16[256,512], index: 5, kind: input, shape index: {}]
  %s6 = inlined_call_operand.vmem [shape: f32[1,512], index: 6, kind: input, shape index: {}]
  %s7 = inlined_call_operand.hbm [shape: bf16[512,128], index: 7, kind: input, shape index: {}]
  %s8 = inlined_call_operand.vmem [shape: f32[1,128], index: 8, kind: input, shape index: {}]
  %s9 = inlined_call_operand.hbm [shape: bf16[16,128], index: 9, kind: output, shape index: {}]
  %s10 = sld [smem:[#allocation0]]
  $region62: #{tpu_custom_call.1} parent=0
    _
  %s12 = ssub.s32 1, %s10
  %s13 = scalar_select 0, %s12, %s10
  $region1: #{tpu_custom_call.1} parent=0
    #allocation2 [shape = 'u8[8192]{0}', space=vmem, size = 0x2000, scoped, tag = 'input window, operand 0, single buffered']
    #allocation3 [shape = 's32[1]{0}', space=sflag, size = 0x4, scoped, tag = 'scoped memory for tpu_custom_call.1']
    #allocation4 [shape = 's32[1]{0}', space=sflag, size = 0x4, scoped, tag = 'scoped memory for tpu_custom_call.1']
    #allocation5 [shape = 'u8[4096]{0}', space=vmem, size = 0x1000, scoped, tag = 'input window, operand 3, single buffered']
    #allocation6 [shape = 's32[1]{0}', space=sflag, size = 0x4, scoped, tag = 'scoped memory for tpu_custom_call.1']
    #allocation7 [shape = 'u8[262144]{0}', space=vmem, size = 0x40000, scoped, tag = 'input window, operand 5, single buffered']
    #allocation8 [shape = 'u8[131072]{0}', space=vmem, size = 0x20000, scoped, tag = 'input window, operand 7, single buffered']
    #allocation9 [shape = 's32[1]{0}', space=sflag, size = 0x4, scoped, tag = 'scoped memory for tpu_custom_call.1']
    #allocation10 [shape = 'u8[4096]{0}', space=vmem, size = 0x1000, scoped, tag = 'output window, operand 0, single buffered']
    %14 = vsyncpa [#allocation3], 0
    %15 = vsyncpa [#allocation6], 0
    %16 = vsyncpa [#allocation9], 0
    %17 = vsyncpa [#allocation4], 0
    // Predicated region
    $region2: #{tpu_custom_call.1} parent=1 // pred_check
      _
    $region3: #{tpu_custom_call.1} parent=1 // pred_check_branch
      %19 = sbr.rel (0) target = $region5
    $region4: #{tpu_custom_call.1} parent=1 // pred_region
      %s21 = ssub.s32 256, 256
      %22 = vsyncadd [#allocation3], %s21
      %s23 = sshll.u32 [#allocation2], 4
      %s24 = int_to_ptr.vmem [resolvable:$true] %s23
      %29 = dma.hbm_to_vmem [thread:$0]  %s0, 256, %s24, [#allocation3], 128, 128, 8
    $region5: #{tpu_custom_call.1} parent=1 // pred_fallthru
      _
    // Predicated region
    $region6: #{tpu_custom_call.1} parent=1 // pred_check
      _
    $region7: #{tpu_custom_call.1} parent=1 // pred_check_branch
      %31 = sbr.rel (0) target = $region9
    $region8: #{tpu_custom_call.1} parent=1 // pred_region
      _
    $region9: #{tpu_custom_call.1} parent=1 // pred_fallthru
      _
    // Predicated region
    $region10: #{tpu_custom_call.1} parent=1 // pred_check
      _
    $region11: #{tpu_custom_call.1} parent=1 // pred_check_branch
      %33 = sbr.rel (0) target = $region13
    $region12: #{tpu_custom_call.1} parent=1 // pred_region
      _
    $region13: #{tpu_custom_call.1} parent=1 // pred_fallthru
      _
    // Predicated region
    $region14: #{tpu_custom_call.1} parent=1 // pred_check
      _
    $region15: #{tpu_custom_call.1} parent=1 // pred_check_branch
      %35 = sbr.rel (0) target = $region17
    $region16: #{tpu_custom_call.1} parent=1 // pred_region
      %s37 = ssub.s32 128, 128
      %38 = vsyncadd [#allocation6], %s37
      %s40 = sshll.u32 [#allocation5], 4
      %s41 = int_to_ptr.vmem [resolvable:$true] %s40
      %43 = dma.hbm_to_vmem [thread:$0]  %s3, 128, %s41, [#allocation6]
    $region17: #{tpu_custom_call.1} parent=1 // pred_fallthru
      _
    // Predicated region
    $region18: #{tpu_custom_call.1} parent=1 // pred_check
      _
    $region19: #{tpu_custom_call.1} parent=1 // pred_check_branch
      %45 = sbr.rel (0) target = $region21
    $region20: #{tpu_custom_call.1} parent=1 // pred_region
      _
    $region21: #{tpu_custom_call.1} parent=1 // pred_fallthru
      _
    // Predicated region
    $region22: #{tpu_custom_call.1} parent=1 // pred_check
      _
    $region23: #{tpu_custom_call.1} parent=1 // pred_check_branch
      %47 = sbr.rel (0) target = $region25
    $region24: #{tpu_custom_call.1} parent=1 // pred_region
      %s49 = ssub.s32 8192, 8192
      %50 = vsyncadd [#allocation6], %s49
      %s51 = sshll.u32 [#allocation7], 4
      %s52 = int_to_ptr.vmem [resolvable:$true] %s51
      %57 = dma.hbm_to_vmem [thread:$0]  %s5, 8192, %s52, [#allocation6], 256, 256, 16
    $region25: #{tpu_custom_call.1} parent=1 // pred_fallthru
      _
    // Predicated region
    $region26: #{tpu_custom_call.1} parent=1 // pred_check
      _
    $region27: #{tpu_custom_call.1} parent=1 // pred_check_branch
      %59 = sbr.rel (0) target = $region29
    $region28: #{tpu_custom_call.1} parent=1 // pred_region
      _
    $region29: #{tpu_custom_call.1} parent=1 // pred_fallthru
      _
    // Predicated region
    $region30: #{tpu_custom_call.1} parent=1 // pred_check
      _
    $region31: #{tpu_custom_call.1} parent=1 // pred_check_branch
      %61 = sbr.rel (0) target = $region33
    $region32: #{tpu_custom_call.1} parent=1 // pred_region
      %s63 = ssub.s32 4096, 4096
      %64 = vsyncadd [#allocation9], %s63
      %s65 = sshll.u32 [#allocation8], 4
      %s66 = int_to_ptr.vmem [resolvable:$true] %s65
      %71 = dma.hbm_to_vmem [thread:$0]  %s7, 4096, %s66, [#allocation9], 64, 64, 4
    $region33: #{tpu_custom_call.1} parent=1 // pred_fallthru
      _
    // Predicated region
    $region34: #{tpu_custom_call.1} parent=1 // pred_check
      _
    $region35: #{tpu_custom_call.1} parent=1 // pred_check_branch
      %73 = sbr.rel (0) target = $region37
    $region36: #{tpu_custom_call.1} parent=1 // pred_region
      _
    $region37: #{tpu_custom_call.1} parent=1 // pred_fallthru
      _
    // Predicated region
    $region38: #{tpu_custom_call.1} parent=1 // pred_check
      _
    $region39: #{tpu_custom_call.1} parent=1 // pred_check_branch
      %75 = sbr.rel (0) target = $region41
    $region40: #{tpu_custom_call.1} parent=1 // pred_region
      %76 = dma.done [#allocation3], 256
    $region41: #{tpu_custom_call.1} parent=1 // pred_fallthru
      _
    // Predicated region
    $region42: #{tpu_custom_call.1} parent=1 // pred_check
      _
    $region43: #{tpu_custom_call.1} parent=1 // pred_check_branch
      %78 = sbr.rel (0) target = $region45
    $region44: #{tpu_custom_call.1} parent=1 // pred_region
      %79 = dma.done [#allocation6], 128
    $region45: #{tpu_custom_call.1} parent=1 // pred_fallthru
      _
    // Predicated region
    $region46: #{tpu_custom_call.1} parent=1 // pred_check
      _
    $region47: #{tpu_custom_call.1} parent=1 // pred_check_branch
      %81 = sbr.rel (0) target = $region49
    $region48: #{tpu_custom_call.1} parent=1 // pred_region
      %82 = dma.done [#allocation6], 8192
    $region49: #{tpu_custom_call.1} parent=1 // pred_fallthru
      _
    // Predicated region
    $region50: #{tpu_custom_call.1} parent=1 // pred_check
      _
    $region51: #{tpu_custom_call.1} parent=1 // pred_check_branch
      %84 = sbr.rel (0) target = $region53
    $region52: #{tpu_custom_call.1} parent=1 // pred_region
      %85 = dma.done [#allocation9], 4096
    $region53: #{tpu_custom_call.1} parent=1 // pred_fallthru
      _
    %v87 = vld [vmem:[#allocation2] sm:$0xff]
    %v88 = vld [vmem:[#allocation2 + $0x8] sm:$0xff]
    %v89 = vpack.c.bf16 %v88, %v87
    %v90 = vld [vmem:[%s1] sm:$0xff]
    %v91 = vld [vmem:[%s1 + $0x8] sm:$0xff]
    %v92 = vpack.c.bf16 %v91, %v90
    %v93 = vld [vmem:[%s2] sm:$0xff]
    %v94 = vld [vmem:[%s2 + $0x8] sm:$0xff]
    %v95 = vld [vmem:[%s2 + $0x10] sm:$0xff]
    %v96 = vld [vmem:[#allocation5] sm:$0xff]
    %v98 = vunpack.c.l.b16 %v96
    %v99 = vunpack.c.h.b16 %v96
    %v100 = vpack.c.b16 %v98, %v98
    %v101 = vpack.c.b16 %v99, %v99
    %vm102 = vcmask 64512
    %v104 = vsel %vm102, %v92, 0
    %vm106 = vcmask 1043456
    %v108 = vsel %vm106, %v100, 0
    %v111 = vsel %vm106, %v101, 0
    %113 = vmatprep.subr.bf16.mxu0 0
    %114 = vmatpush1.bf16.msra.mxu0 0
    %115 = vmatprep.subr.bf16.mxu0 0
    %116 = vmatpush1.bf16.msra.mxu0 0
    %117 = vmatprep.subr.bf16.mxu0 0
    %118 = vmatpush1.bf16.msra.mxu0 0
    %119 = vmatprep.subr.bf16.mxu0 0
    %120 = vmatpush1.bf16.msra.mxu0 0
    %121 = vmatprep.subr.bf16.mxu0 0
    %122 = vmatpush1.bf16.msra.mxu0 0
    %123 = vmatprep.subr.bf16.mxu0 0
    %124 = vmatpush1.bf16.msra.mxu0 0
    %125 = vmatprep.subr.bf16.mxu0 0
    %126 = vmatpush1.bf16.msra.mxu0 0
    %127 = vmatprep.subr.bf16.mxu0 %v111
    %128 = vmatpush1.bf16.msra.mxu0 %v108
    %129 = vmatprep.subr.bf16.mxu0 0
    %130 = vmatpush2.bf16.msra.mxu0 0
    %131 = vmatprep.subr.bf16.mxu0 0
    %132 = vmatpush2.bf16.msra.mxu0 0
    %133 = vmatprep.subr.bf16.mxu0 0
    %134 = vmatpush2.bf16.msra.mxu0 0
    %135 = vmatprep.subr.bf16.mxu0 0
    %136 = vmatpush2.bf16.msra.mxu0 0
    %137 = vmatprep.subr.bf16.mxu0 0
    %138 = vmatpush2.bf16.msra.mxu0 0
    %139 = vmatprep.subr.bf16.mxu0 0
    %140 = vmatpush2.bf16.msra.mxu0 0
    %141 = vmatprep.subr.bf16.mxu0 0
    %142 = vmatpush2.bf16.msra.mxu0 0
    %143 = vmatprep.subr.bf16.mxu0 0
    %144 = vmatpush2.bf16.msra.mxu0 0
    %145 = vmatprep.mubr.bf16.mxu0 0
    %146 = vmatmul.mubr.bf16.gmra.mxu0 %v104
    %v147 = vpop.f32.mrf.mxu0
    %v148 = vadd.f32 0.0, %v147
    %v149 = vpop.f32.mrf.mxu0
    %v150 = vadd.f32 0.0, %v149
    %v151 = vpop.f32.mrf.mxu0
    %v152 = vadd.f32 0.0, %v151
    %v153 = vpop.f32.mrf.mxu0
    %v154 = vadd.f32 0.0, %v153
    %155 = vdwg.mxu0
    %v159 = vunpack.c.l.b16 %v93
    %v160 = vunpack.c.h.b16 %v93
    %v161 = vunpack.c.l.b16 %v94
    %v162 = vunpack.c.h.b16 %v94
    %v163 = vunpack.c.l.b16 %v95
    %v164 = vunpack.c.h.b16 %v95
    %v165 = vpack.c.b16 %v161, %v159
    %v166 = vpack.c.b16 %v162, %v160
    %v167 = vpack.c.b16 %v163, %v163
    %v168 = vpack.c.b16 %v164, %v164
    %vm171 = vcmask 195584
    %v173 = vsel %vm171, %v89, 0
    %v176 = vsel %vm106, %v167, 0
    %v179 = vsel %vm106, %v168, 0
    %181 = vmatprep.subr.bf16.mxu0 0
    %182 = vmatpush1.bf16.msra.mxu0 0
    %183 = vmatprep.subr.bf16.mxu0 0
    %184 = vmatpush1.bf16.msra.mxu0 0
    %185 = vmatprep.subr.bf16.mxu0 0
    %186 = vmatpush1.bf16.msra.mxu0 0
    %187 = vmatprep.subr.bf16.mxu0 0
    %188 = vmatpush1.bf16.msra.mxu0 0
    %189 = vmatprep.subr.bf16.mxu0 0
    %190 = vmatpush1.bf16.msra.mxu0 0
    %191 = vmatprep.subr.bf16.mxu0 0
    %192 = vmatpush1.bf16.msra.mxu0 0
    %193 = vmatprep.subr.bf16.mxu0 %v179
    %194 = vmatpush1.bf16.msra.mxu0 %v176
    %195 = vmatprep.subr.bf16.mxu0 %v166
    %196 = vmatpush1.bf16.msra.mxu0 %v165
    %197 = vmatprep.subr.bf16.mxu0 0
    %198 = vmatpush2.bf16.msra.mxu0 0
    %199 = vmatprep.subr.bf16.mxu0 0
    %200 = vmatpush2.bf16.msra.mxu0 0
    %201 = vmatprep.subr.bf16.mxu0 0
    %202 = vmatpush2.bf16.msra.mxu0 0
    %203 = vmatprep.subr.bf16.mxu0 0
    %204 = vmatpush2.bf16.msra.mxu0 0
    %205 = vmatprep.subr.bf16.mxu0 0
    %206 = vmatpush2.bf16.msra.mxu0 0
    %207 = vmatprep.subr.bf16.mxu0 0
    %208 = vmatpush2.bf16.msra.mxu0 0
    %209 = vmatprep.subr.bf16.mxu0 0
    %210 = vmatpush2.bf16.msra.mxu0 0
    %211 = vmatprep.subr.bf16.mxu0 0
    %212 = vmatpush2.bf16.msra.mxu0 0
    %213 = vmatprep.mubr.bf16.mxu0 0
    %214 = vmatmul.mubr.bf16.gmra.mxu0 %v173
    %v215 = vpop.f32.mrf.mxu0
    %v216 = vadd.f32 %v148, %v215
    %v217 = vpop.f32.mrf.mxu0
    %v218 = vadd.f32 %v150, %v217
    %v219 = vpop.f32.mrf.mxu0
    %v220 = vadd.f32 %v152, %v219
    %v221 = vpop.f32.mrf.mxu0
    %v222 = vadd.f32 %v154, %v221
    %223 = vdwg.mxu0
    %v224 = vld [vmem:[%s4] sm:$0x3]
    %v226 = vlaneseq
    %v227 = vshrl.u32 %v226, 7
    %v228 = vsub.s32 0, %v227
    %v229 = vrot.slane %v224, %v228
    %v230 = vlaneseq
    %v231 = vshrl.u32 %v230, 7
    %v232 = vsub.s32 1, %v231
    %v233 = vrot.slane %v224, %v232
    %v236 = vadd.f32 %v216, %v229
    %v237 = vadd.f32 %v218, %v233
    %v238 = vadd.f32 %v220, %v229
    %v239 = vadd.f32 %v222, %v233
    %v240 = vmax.f32 %v236, 0.0
    %v241 = vmax.f32 %v237, 0.0
    %v242 = vmax.f32 %v238, 0.0
    %v243 = vmax.f32 %v239, 0.0
    %v244 = vpack.c.bf16 %v242, %v240
    %v245 = vpack.c.bf16 %v243, %v241
    %v246 = vld [vmem:[#allocation7] sm:$0xff]
    %v247 = vld [vmem:[#allocation7 + $0x10] sm:$0xff]
    %v248 = vld [vmem:[#allocation7 + $0x20] sm:$0xff]
    %v249 = vld [vmem:[#allocation7 + $0x30] sm:$0xff]
    %v250 = vld [vmem:[#allocation7 + $0x40] sm:$0xff]
    %v251 = vld [vmem:[#allocation7 + $0x50] sm:$0xff]
    %v252 = vld [vmem:[#allocation7 + $0x60] sm:$0xff]
    %v253 = vld [vmem:[#allocation7 + $0x70] sm:$0xff]
    %v254 = vld [vmem:[#allocation7 + $0x80] sm:$0xff]
    %v255 = vld [vmem:[#allocation7 + $0x90] sm:$0xff]
    %v256 = vld [vmem:[#allocation7 + $0xa0] sm:$0xff]
    %v257 = vld [vmem:[#allocation7 + $0xb0] sm:$0xff]
    %v258 = vld [vmem:[#allocation7 + $0xc0] sm:$0xff]
    %v259 = vld [vmem:[#allocation7 + $0xd0] sm:$0xff]
    %v260 = vld [vmem:[#allocation7 + $0xe0] sm:$0xff]
    %v261 = vld [vmem:[#allocation7 + $0xf0] sm:$0xff]
    %v262 = vld [vmem:[#allocation7 + $0x100] sm:$0xff]
    %v263 = vld [vmem:[#allocation7 + $0x110] sm:$0xff]
    %v264 = vld [vmem:[#allocation7 + $0x120] sm:$0xff]
    %v265 = vld [vmem:[#allocation7 + $0x130] sm:$0xff]
    %v266 = vld [vmem:[#allocation7 + $0x140] sm:$0xff]
    %v267 = vld [vmem:[#allocation7 + $0x150] sm:$0xff]
    %v268 = vld [vmem:[#allocation7 + $0x160] sm:$0xff]
    %v269 = vld [vmem:[#allocation7 + $0x170] sm:$0xff]
    %v270 = vld [vmem:[#allocation7 + $0x180] sm:$0xff]
    %v271 = vld [vmem:[#allocation7 + $0x190] sm:$0xff]
    %v272 = vld [vmem:[#allocation7 + $0x1a0] sm:$0xff]
    %v273 = vld [vmem:[#allocation7 + $0x1b0] sm:$0xff]
    %v274 = vld [vmem:[#allocation7 + $0x1c0] sm:$0xff]
    %v275 = vld [vmem:[#allocation7 + $0x1d0] sm:$0xff]
    %v276 = vld [vmem:[#allocation7 + $0x1e0] sm:$0xff]
    %v277 = vld [vmem:[#allocation7 + $0x1f0] sm:$0xff]
    %v278 = vld [vmem:[%s6] sm:$0x3]
    %v280 = vlaneseq
    %v281 = vshrl.u32 %v280, 7
    %v282 = vsub.s32 0, %v281
    %v283 = vrot.slane %v278, %v282
    %v284 = vlaneseq
    %v285 = vshrl.u32 %v284, 7
    %v286 = vsub.s32 1, %v285
    %v287 = vrot.slane %v278, %v286
    %v322 = vunpack.c.l.b16 %v246
    %v323 = vunpack.c.h.b16 %v246
    %v324 = vunpack.c.l.b16 %v247
    %v325 = vunpack.c.h.b16 %v247
    %v326 = vunpack.c.l.b16 %v248
    %v327 = vunpack.c.h.b16 %v248
    %v328 = vunpack.c.l.b16 %v249
    %v329 = vunpack.c.h.b16 %v249
    %v330 = vunpack.c.l.b16 %v250
    %v331 = vunpack.c.h.b16 %v250
    %v332 = vunpack.c.l.b16 %v251
    %v333 = vunpack.c.h.b16 %v251
    %v334 = vunpack.c.l.b16 %v252
    %v335 = vunpack.c.h.b16 %v252
    %v336 = vunpack.c.l.b16 %v253
    %v337 = vunpack.c.h.b16 %v253
    %v338 = vunpack.c.l.b16 %v254
    %v339 = vunpack.c.h.b16 %v254
    %v340 = vunpack.c.l.b16 %v255
    %v341 = vunpack.c.h.b16 %v255
    %v342 = vunpack.c.l.b16 %v256
    %v343 = vunpack.c.h.b16 %v256
    %v344 = vunpack.c.l.b16 %v257
    %v345 = vunpack.c.h.b16 %v257
    %v346 = vunpack.c.l.b16 %v258
    %v347 = vunpack.c.h.b16 %v258
    %v348 = vunpack.c.l.b16 %v259
    %v349 = vunpack.c.h.b16 %v259
    %v350 = vunpack.c.l.b16 %v260
    %v351 = vunpack.c.h.b16 %v260
    %v352 = vunpack.c.l.b16 %v261
    %v353 = vunpack.c.h.b16 %v261
    %v354 = vunpack.c.l.b16 %v262
    %v355 = vunpack.c.h.b16 %v262
    %v356 = vunpack.c.l.b16 %v263
    %v357 = vunpack.c.h.b16 %v263
    %v358 = vunpack.c.l.b16 %v264
    %v359 = vunpack.c.h.b16 %v264
    %v360 = vunpack.c.l.b16 %v265
    %v361 = vunpack.c.h.b16 %v265
    %v362 = vunpack.c.l.b16 %v266
    %v363 = vunpack.c.h.b16 %v266
    %v364 = vunpack.c.l.b16 %v267
    %v365 = vunpack.c.h.b16 %v267
    %v366 = vunpack.c.l.b16 %v268
    %v367 = vunpack.c.h.b16 %v268
    %v368 = vunpack.c.l.b16 %v269
    %v369 = vunpack.c.h.b16 %v269
    %v370 = vunpack.c.l.b16 %v270
    %v371 = vunpack.c.h.b16 %v270
    %v372 = vunpack.c.l.b16 %v271
    %v373 = vunpack.c.h.b16 %v271
    %v374 = vunpack.c.l.b16 %v272
    %v375 = vunpack.c.h.b16 %v272
    %v376 = vunpack.c.l.b16 %v273
    %v377 = vunpack.c.h.b16 %v273
    %v378 = vunpack.c.l.b16 %v274
    %v379 = vunpack.c.h.b16 %v274
    %v380 = vunpack.c.l.b16 %v275
    %v381 = vunpack.c.h.b16 %v275
    %v382 = vunpack.c.l.b16 %v276
    %v383 = vunpack.c.h.b16 %v276
    %v384 = vunpack.c.l.b16 %v277
    %v385 = vunpack.c.h.b16 %v277
    %v386 = vpack.c.b16 %v324, %v322
    %v387 = vpack.c.b16 %v325, %v323
    %v388 = vpack.c.b16 %v328, %v326
    %v389 = vpack.c.b16 %v329, %v327
    %v390 = vpack.c.b16 %v332, %v330
    %v391 = vpack.c.b16 %v333, %v331
    %v392 = vpack.c.b16 %v336, %v334
    %v393 = vpack.c.b16 %v337, %v335
    %v394 = vpack.c.b16 %v340, %v338
    %v395 = vpack.c.b16 %v341, %v339
    %v396 = vpack.c.b16 %v344, %v342
    %v397 = vpack.c.b16 %v345, %v343
    %v398 = vpack.c.b16 %v348, %v346
    %v399 = vpack.c.b16 %v349, %v347
    %v400 = vpack.c.b16 %v352, %v350
    %v401 = vpack.c.b16 %v353, %v351
    %v402 = vpack.c.b16 %v356, %v354
    %v403 = vpack.c.b16 %v357, %v355
    %v404 = vpack.c.b16 %v360, %v358
    %v405 = vpack.c.b16 %v361, %v359
    %v406 = vpack.c.b16 %v364, %v362
    %v407 = vpack.c.b16 %v365, %v363
    %v408 = vpack.c.b16 %v368, %v366
    %v409 = vpack.c.b16 %v369, %v367
    %v410 = vpack.c.b16 %v372, %v370
    %v411 = vpack.c.b16 %v373, %v371
    %v412 = vpack.c.b16 %v376, %v374
    %v413 = vpack.c.b16 %v377, %v375
    %v414 = vpack.c.b16 %v380, %v378
    %v415 = vpack.c.b16 %v381, %v379
    %v416 = vpack.c.b16 %v384, %v382
    %v417 = vpack.c.b16 %v385, %v383
    %450 = vmatprep.subr.bf16.mxu0 %v401
    %451 = vmatpush1.bf16.msra.mxu0 %v400
    %452 = vmatprep.subr.bf16.mxu0 %v399
    %453 = vmatpush1.bf16.msra.mxu0 %v398
    %454 = vmatprep.subr.bf16.mxu0 %v397
    %455 = vmatpush1.bf16.msra.mxu0 %v396
    %456 = vmatprep.subr.bf16.mxu0 %v395
    %457 = vmatpush1.bf16.msra.mxu0 %v394
    %458 = vmatprep.subr.bf16.mxu0 %v393
    %459 = vmatpush1.bf16.msra.mxu0 %v392
    %460 = vmatprep.subr.bf16.mxu0 %v391
    %461 = vmatpush1.bf16.msra.mxu0 %v390
    %462 = vmatprep.subr.bf16.mxu0 %v389
    %463 = vmatpush1.bf16.msra.mxu0 %v388
    %464 = vmatprep.subr.bf16.mxu0 %v387
    %465 = vmatpush1.bf16.msra.mxu0 %v386
    %466 = vmatprep.subr.bf16.mxu0 %v417
    %467 = vmatpush2.bf16.msra.mxu0 %v416
    %468 = vmatprep.subr.bf16.mxu0 %v415
    %469 = vmatpush2.bf16.msra.mxu0 %v414
    %470 = vmatprep.subr.bf16.mxu0 %v413
    %471 = vmatpush2.bf16.msra.mxu0 %v412
    %472 = vmatprep.subr.bf16.mxu0 %v411
    %473 = vmatpush2.bf16.msra.mxu0 %v410
    %474 = vmatprep.subr.bf16.mxu0 %v409
    %475 = vmatpush2.bf16.msra.mxu0 %v408
    %476 = vmatprep.subr.bf16.mxu0 %v407
    %477 = vmatpush2.bf16.msra.mxu0 %v406
    %478 = vmatprep.subr.bf16.mxu0 %v405
    %479 = vmatpush2.bf16.msra.mxu0 %v404
    %480 = vmatprep.subr.bf16.mxu0 %v403
    %481 = vmatpush2.bf16.msra.mxu0 %v402
    %482 = vmatprep.mubr.bf16.mxu0 %v245
    %483 = vmatmul.mubr.bf16.gmra.mxu0 %v244
    %v484 = vpop.f32.mrf.mxu0
    %v485 = vadd.f32 %v283, %v484
    %v486 = vpop.f32.mrf.mxu0
    %v487 = vadd.f32 %v287, %v486
    %v488 = vpop.f32.mrf.mxu0
    %v489 = vadd.f32 %v283, %v488
    %v490 = vpop.f32.mrf.mxu0
    %v491 = vadd.f32 %v287, %v490
    %492 = vdwg.mxu0
    %v493 = vmax.f32 %v485, 0.0
    %v494 = vmax.f32 %v487, 0.0
    %v495 = vmax.f32 %v489, 0.0
    %v496 = vmax.f32 %v491, 0.0
    %v497 = vpack.c.bf16 %v495, %v493
    %v498 = vpack.c.bf16 %v496, %v494
    %v499 = vld [vmem:[#allocation8] sm:$0xf]
    %v500 = vld [vmem:[#allocation8 + $0x4] sm:$0xf]
    %v501 = vld [vmem:[#allocation8 + $0x8] sm:$0xf]
    %v502 = vld [vmem:[#allocation8 + $0xc] sm:$0xf]
    %v503 = vld [vmem:[#allocation8 + $0x10] sm:$0xf]
    %v504 = vld [vmem:[#allocation8 + $0x14] sm:$0xf]
    %v505 = vld [vmem:[#allocation8 + $0x18] sm:$0xf]
    %v506 = vld [vmem:[#allocation8 + $0x1c] sm:$0xf]
    %v507 = vld [vmem:[#allocation8 + $0x20] sm:$0xf]
    %v508 = vld [vmem:[#allocation8 + $0x24] sm:$0xf]
    %v509 = vld [vmem:[#allocation8 + $0x28] sm:$0xf]
    %v510 = vld [vmem:[#allocation8 + $0x2c] sm:$0xf]
    %v511 = vld [vmem:[#allocation8 + $0x30] sm:$0xf]
    %v512 = vld [vmem:[#allocation8 + $0x34] sm:$0xf]
    %v513 = vld [vmem:[#allocation8 + $0x38] sm:$0xf]
    %v514 = vld [vmem:[#allocation8 + $0x3c] sm:$0xf]
    %v515 = vld [vmem:[#allocation8 + $0x40] sm:$0xf]
    %v516 = vld [vmem:[#allocation8 + $0x44] sm:$0xf]
    %v517 = vld [vmem:[#allocation8 + $0x48] sm:$0xf]
    %v518 = vld [vmem:[#allocation8 + $0x4c] sm:$0xf]
    %v519 = vld [vmem:[#allocation8 + $0x50] sm:$0xf]
    %v520 = vld [vmem:[#allocation8 + $0x54] sm:$0xf]
    %v521 = vld [vmem:[#allocation8 + $0x58] sm:$0xf]
    %v522 = vld [vmem:[#allocation8 + $0x5c] sm:$0xf]
    %v523 = vld [vmem:[#allocation8 + $0x60] sm:$0xf]
    %v524 = vld [vmem:[#allocation8 + $0x64] sm:$0xf]
    %v525 = vld [vmem:[#allocation8 + $0x68] sm:$0xf]
    %v526 = vld [vmem:[#allocation8 + $0x6c] sm:$0xf]
    %v527 = vld [vmem:[#allocation8 + $0x70] sm:$0xf]
    %v528 = vld [vmem:[#allocation8 + $0x74] sm:$0xf]
    %v529 = vld [vmem:[#allocation8 + $0x78] sm:$0xf]
    %v530 = vld [vmem:[#allocation8 + $0x7c] sm:$0xf]
    %v531 = vld [vmem:[#allocation7 + $0x8] sm:$0xff]
    %v532 = vld [vmem:[#allocation7 + $0x18] sm:$0xff]
    %v533 = vld [vmem:[#allocation7 + $0x28] sm:$0xff]
    %v534 = vld [vmem:[#allocation7 + $0x38] sm:$0xff]
    %v535 = vld [vmem:[#allocation7 + $0x48] sm:$0xff]
    %v536 = vld [vmem:[#allocation7 + $0x58] sm:$0xff]
    %v537 = vld [vmem:[#allocation7 + $0x68] sm:$0xff]
    %v538 = vld [vmem:[#allocation7 + $0x78] sm:$0xff]
    %v539 = vld [vmem:[#allocation7 + $0x88] sm:$0xff]
    %v540 = vld [vmem:[#allocation7 + $0x98] sm:$0xff]
    %v541 = vld [vmem:[#allocation7 + $0xa8] sm:$0xff]
    %v542 = vld [vmem:[#allocation7 + $0xb8] sm:$0xff]
    %v543 = vld [vmem:[#allocation7 + $0xc8] sm:$0xff]
    %v544 = vld [vmem:[#allocation7 + $0xd8] sm:$0xff]
    %v545 = vld [vmem:[#allocation7 + $0xe8] sm:$0xff]
    %v546 = vld [vmem:[#allocation7 + $0xf8] sm:$0xff]
    %v547 = vld [vmem:[#allocation7 + $0x108] sm:$0xff]
    %v548 = vld [vmem:[#allocation7 + $0x118] sm:$0xff]
    %v549 = vld [vmem:[#allocation7 + $0x128] sm:$0xff]
    %v550 = vld [vmem:[#allocation7 + $0x138] sm:$0xff]
    %v551 = vld [vmem:[#allocation7 + $0x148] sm:$0xff]
    %v552 = vld [vmem:[#allocation7 + $0x158] sm:$0xff]
    %v553 = vld [vmem:[#allocation7 + $0x168] sm:$0xff]
    %v554 = vld [vmem:[#allocation7 + $0x178] sm:$0xff]
    %v555 = vld [vmem:[#allocation7 + $0x188] sm:$0xff]
    %v556 = vld [vmem:[#allocation7 + $0x198] sm:$0xff]
    %v557 = vld [vmem:[#allocation7 + $0x1a8] sm:$0xff]
    %v558 = vld [vmem:[#allocation7 + $0x1b8] sm:$0xff]
    %v559 = vld [vmem:[#allocation7 + $0x1c8] sm:$0xff]
    %v560 = vld [vmem:[#allocation7 + $0x1d8] sm:$0xff]
    %v561 = vld [vmem:[#allocation7 + $0x1e8] sm:$0xff]
    %v562 = vld [vmem:[#allocation7 + $0x1f8] sm:$0xff]
    %v563 = vld [vmem:[%s6 + $0x2] sm:$0x3]
    %v565 = vlaneseq
    %v566 = vshrl.u32 %v565, 7
    %v567 = vsub.s32 0, %v566
    %v568 = vrot.slane %v563, %v567
    %v569 = vlaneseq
    %v570 = vshrl.u32 %v569, 7
    %v571 = vsub.s32 1, %v570
    %v572 = vrot.slane %v563, %v571
    %v607 = vunpack.c.l.b16 %v531
    %v608 = vunpack.c.h.b16 %v531
    %v609 = vunpack.c.l.b16 %v532
    %v610 = vunpack.c.h.b16 %v532
    %v611 = vunpack.c.l.b16 %v533
    %v612 = vunpack.c.h.b16 %v533
    %v613 = vunpack.c.l.b16 %v534
    %v614 = vunpack.c.h.b16 %v534
    %v615 = vunpack.c.l.b16 %v535
    %v616 = vunpack.c.h.b16 %v535
    %v617 = vunpack.c.l.b16 %v536
    %v618 = vunpack.c.h.b16 %v536
    %v619 = vunpack.c.l.b16 %v537
    %v620 = vunpack.c.h.b16 %v537
    %v621 = vunpack.c.l.b16 %v538
    %v622 = vunpack.c.h.b16 %v538
    %v623 = vunpack.c.l.b16 %v539
    %v624 = vunpack.c.h.b16 %v539
    %v625 = vunpack.c.l.b16 %v540
    %v626 = vunpack.c.h.b16 %v540
    %v627 = vunpack.c.l.b16 %v541
    %v628 = vunpack.c.h.b16 %v541
    %v629 = vunpack.c.l.b16 %v542
    %v630 = vunpack.c.h.b16 %v542
    %v631 = vunpack.c.l.b16 %v543
    %v632 = vunpack.c.h.b16 %v543
    %v633 = vunpack.c.l.b16 %v544
    %v634 = vunpack.c.h.b16 %v544
    %v635 = vunpack.c.l.b16 %v545
    %v636 = vunpack.c.h.b16 %v545
    %v637 = vunpack.c.l.b16 %v546
    %v638 = vunpack.c.h.b16 %v546
    %v639 = vunpack.c.l.b16 %v547
    %v640 = vunpack.c.h.b16 %v547
    %v641 = vunpack.c.l.b16 %v548
    %v642 = vunpack.c.h.b16 %v548
    %v643 = vunpack.c.l.b16 %v549
    %v644 = vunpack.c.h.b16 %v549
    %v645 = vunpack.c.l.b16 %v550
    %v646 = vunpack.c.h.b16 %v550
    %v647 = vunpack.c.l.b16 %v551
    %v648 = vunpack.c.h.b16 %v551
    %v649 = vunpack.c.l.b16 %v552
    %v650 = vunpack.c.h.b16 %v552
    %v651 = vunpack.c.l.b16 %v553
    %v652 = vunpack.c.h.b16 %v553
    %v653 = vunpack.c.l.b16 %v554
    %v654 = vunpack.c.h.b16 %v554
    %v655 = vunpack.c.l.b16 %v555
    %v656 = vunpack.c.h.b16 %v555
    %v657 = vunpack.c.l.b16 %v556
    %v658 = vunpack.c.h.b16 %v556
    %v659 = vunpack.c.l.b16 %v557
    %v660 = vunpack.c.h.b16 %v557
    %v661 = vunpack.c.l.b16 %v558
    %v662 = vunpack.c.h.b16 %v558
    %v663 = vunpack.c.l.b16 %v559
    %v664 = vunpack.c.h.b16 %v559
    %v665 = vunpack.c.l.b16 %v560
    %v666 = vunpack.c.h.b16 %v560
    %v667 = vunpack.c.l.b16 %v561
    %v668 = vunpack.c.h.b16 %v561
    %v669 = vunpack.c.l.b16 %v562
    %v670 = vunpack.c.h.b16 %v562
    %v671 = vpack.c.b16 %v609, %v607
    %v672 = vpack.c.b16 %v610, %v608
    %v673 = vpack.c.b16 %v613, %v611
    %v674 = vpack.c.b16 %v614, %v612
    %v675 = vpack.c.b16 %v617, %v615
    %v676 = vpack.c.b16 %v618, %v616
    %v677 = vpack.c.b16 %v621, %v619
    %v678 = vpack.c.b16 %v622, %v620
    %v679 = vpack.c.b16 %v625, %v623
    %v680 = vpack.c.b16 %v626, %v624
    %v681 = vpack.c.b16 %v629, %v627
    %v682 = vpack.c.b16 %v630, %v628
    %v683 = vpack.c.b16 %v633, %v631
    %v684 = vpack.c.b16 %v634, %v632
    %v685 = vpack.c.b16 %v637, %v635
    %v686 = vpack.c.b16 %v638, %v636
    %v687 = vpack.c.b16 %v641, %v639
    %v688 = vpack.c.b16 %v642, %v640
    %v689 = vpack.c.b16 %v645, %v643
    %v690 = vpack.c.b16 %v646, %v644
    %v691 = vpack.c.b16 %v649, %v647
    %v692 = vpack.c.b16 %v650, %v648
    %v693 = vpack.c.b16 %v653, %v651
    %v694 = vpack.c.b16 %v654, %v652
    %v695 = vpack.c.b16 %v657, %v655
    %v696 = vpack.c.b16 %v658, %v656
    %v697 = vpack.c.b16 %v661, %v659
    %v698 = vpack.c.b16 %v662, %v660
    %v699 = vpack.c.b16 %v665, %v663
    %v700 = vpack.c.b16 %v666, %v664
    %v701 = vpack.c.b16 %v669, %v667
    %v702 = vpack.c.b16 %v670, %v668
    %735 = vmatprep.subr.bf16.mxu0 %v686
    %736 = vmatpush1.bf16.msra.mxu0 %v685
    %737 = vmatprep.subr.bf16.mxu0 %v684
    %738 = vmatpush1.bf16.msra.mxu0 %v683
    %739 = vmatprep.subr.bf16.mxu0 %v682
    %740 = vmatpush1.bf16.msra.mxu0 %v681
    %741 = vmatprep.subr.bf16.mxu0 %v680
    %742 = vmatpush1.bf16.msra.mxu0 %v679
    %743 = vmatprep.subr.bf16.mxu0 %v678
    %744 = vmatpush1.bf16.msra.mxu0 %v677
    %745 = vmatprep.subr.bf16.mxu0 %v676
    %746 = vmatpush1.bf16.msra.mxu0 %v675
    %747 = vmatprep.subr.bf16.mxu0 %v674
    %748 = vmatpush1.bf16.msra.mxu0 %v673
    %749 = vmatprep.subr.bf16.mxu0 %v672
    %750 = vmatpush1.bf16.msra.mxu0 %v671
    %751 = vmatprep.subr.bf16.mxu0 %v702
    %752 = vmatpush2.bf16.msra.mxu0 %v701
    %753 = vmatprep.subr.bf16.mxu0 %v700
    %754 = vmatpush2.bf16.msra.mxu0 %v699
    %755 = vmatprep.subr.bf16.mxu0 %v698
    %756 = vmatpush2.bf16.msra.mxu0 %v697
    %757 = vmatprep.subr.bf16.mxu0 %v696
    %758 = vmatpush2.bf16.msra.mxu0 %v695
    %759 = vmatprep.subr.bf16.mxu0 %v694
    %760 = vmatpush2.bf16.msra.mxu0 %v693
    %761 = vmatprep.subr.bf16.mxu0 %v692
    %762 = vmatpush2.bf16.msra.mxu0 %v691
    %763 = vmatprep.subr.bf16.mxu0 %v690
    %764 = vmatpush2.bf16.msra.mxu0 %v689
    %765 = vmatprep.subr.bf16.mxu0 %v688
    %766 = vmatpush2.bf16.msra.mxu0 %v687
    %767 = vmatprep.mubr.bf16.mxu0 %v245
    %768 = vmatmul.mubr.bf16.gmra.mxu0 %v244
    %v769 = vpop.f32.mrf.mxu0
    %v770 = vadd.f32 %v568, %v769
    %v771 = vpop.f32.mrf.mxu0
    %v772 = vadd.f32 %v572, %v771
    %v773 = vpop.f32.mrf.mxu0
    %v774 = vadd.f32 %v568, %v773
    %v775 = vpop.f32.mrf.mxu0
    %v776 = vadd.f32 %v572, %v775
    %777 = vdwg.mxu0
    %v778 = vmax.f32 %v770, 0.0
    %v779 = vmax.f32 %v772, 0.0
    %v780 = vmax.f32 %v774, 0.0
    %v781 = vmax.f32 %v776, 0.0
    %v782 = vpack.c.bf16 %v780, %v778
    %v783 = vpack.c.bf16 %v781, %v779
    %v784 = vld [vmem:[#allocation8 + $0x80] sm:$0xf]
    %v785 = vld [vmem:[#allocation8 + $0x84] sm:$0xf]
    %v786 = vld [vmem:[#allocation8 + $0x88] sm:$0xf]
    %v787 = vld [vmem:[#allocation8 + $0x8c] sm:$0xf]
    %v788 = vld [vmem:[#allocation8 + $0x90] sm:$0xf]
    %v789 = vld [vmem:[#allocation8 + $0x94] sm:$0xf]
    %v790 = vld [vmem:[#allocation8 + $0x98] sm:$0xf]
    %v791 = vld [vmem:[#allocation8 + $0x9c] sm:$0xf]
    %v792 = vld [vmem:[#allocation8 + $0xa0] sm:$0xf]
    %v793 = vld [vmem:[#allocation8 + $0xa4] sm:$0xf]
    %v794 = vld [vmem:[#allocation8 + $0xa8] sm:$0xf]
    %v795 = vld [vmem:[#allocation8 + $0xac] sm:$0xf]
    %v796 = vld [vmem:[#allocation8 + $0xb0] sm:$0xf]
    %v797 = vld [vmem:[#allocation8 + $0xb4] sm:$0xf]
    %v798 = vld [vmem:[#allocation8 + $0xb8] sm:$0xf]
    %v799 = vld [vmem:[#allocation8 + $0xbc] sm:$0xf]
    %v800 = vld [vmem:[#allocation8 + $0xc0] sm:$0xf]
    %v801 = vld [vmem:[#allocation8 + $0xc4] sm:$0xf]
    %v802 = vld [vmem:[#allocation8 + $0xc8] sm:$0xf]
    %v803 = vld [vmem:[#allocation8 + $0xcc] sm:$0xf]
    %v804 = vld [vmem:[#allocation8 + $0xd0] sm:$0xf]
    %v805 = vld [vmem:[#allocation8 + $0xd4] sm:$0xf]
    %v806 = vld [vmem:[#allocation8 + $0xd8] sm:$0xf]
    %v807 = vld [vmem:[#allocation8 + $0xdc] sm:$0xf]
    %v808 = vld [vmem:[#allocation8 + $0xe0] sm:$0xf]
    %v809 = vld [vmem:[#allocation8 + $0xe4] sm:$0xf]
    %v810 = vld [vmem:[#allocation8 + $0xe8] sm:$0xf]
    %v811 = vld [vmem:[#allocation8 + $0xec] sm:$0xf]
    %v812 = vld [vmem:[#allocation8 + $0xf0] sm:$0xf]
    %v813 = vld [vmem:[#allocation8 + $0xf4] sm:$0xf]
    %v814 = vld [vmem:[#allocation8 + $0xf8] sm:$0xf]
    %v815 = vld [vmem:[#allocation8 + $0xfc] sm:$0xf]
    %v848 = vunpack.c.l.b16 %v784
    %v849 = vunpack.c.l.b16 %v785
    %v850 = vunpack.c.l.b16 %v786
    %v851 = vunpack.c.l.b16 %v787
    %v852 = vunpack.c.l.b16 %v788
    %v853 = vunpack.c.l.b16 %v789
    %v854 = vunpack.c.l.b16 %v790
    %v855 = vunpack.c.l.b16 %v791
    %v856 = vunpack.c.l.b16 %v792
    %v857 = vunpack.c.l.b16 %v793
    %v858 = vunpack.c.l.b16 %v794
    %v859 = vunpack.c.l.b16 %v795
    %v860 = vunpack.c.l.b16 %v796
    %v861 = vunpack.c.l.b16 %v797
    %v862 = vunpack.c.l.b16 %v798
    %v863 = vunpack.c.l.b16 %v799
    %v864 = vunpack.c.l.b16 %v800
    %v865 = vunpack.c.l.b16 %v801
    %v866 = vunpack.c.l.b16 %v802
    %v867 = vunpack.c.l.b16 %v803
    %v868 = vunpack.c.l.b16 %v804
    %v869 = vunpack.c.l.b16 %v805
    %v870 = vunpack.c.l.b16 %v806
    %v871 = vunpack.c.l.b16 %v807
    %v872 = vunpack.c.l.b16 %v808
    %v873 = vunpack.c.l.b16 %v809
    %v874 = vunpack.c.l.b16 %v810
    %v875 = vunpack.c.l.b16 %v811
    %v876 = vunpack.c.l.b16 %v812
    %v877 = vunpack.c.l.b16 %v813
    %v878 = vunpack.c.l.b16 %v814
    %v879 = vunpack.c.l.b16 %v815
    %v880 = vpack.c.b16 %v849, %v848
    %v881 = vpack.c.b16 %v851, %v850
    %v882 = vpack.c.b16 %v853, %v852
    %v883 = vpack.c.b16 %v855, %v854
    %v884 = vpack.c.b16 %v857, %v856
    %v885 = vpack.c.b16 %v859, %v858
    %v886 = vpack.c.b16 %v861, %v860
    %v887 = vpack.c.b16 %v863, %v862
    %v888 = vpack.c.b16 %v865, %v864
    %v889 = vpack.c.b16 %v867, %v866
    %v890 = vpack.c.b16 %v869, %v868
    %v891 = vpack.c.b16 %v871, %v870
    %v892 = vpack.c.b16 %v873, %v872
    %v893 = vpack.c.b16 %v875, %v874
    %v894 = vpack.c.b16 %v877, %v876
    %v895 = vpack.c.b16 %v879, %v878
    %912 = vmatprep.subr.bf16.mxu0 0
    %913 = vmatpush1.bf16.msra.mxu0 %v887
    %914 = vmatprep.subr.bf16.mxu0 0
    %915 = vmatpush1.bf16.msra.mxu0 %v886
    %916 = vmatprep.subr.bf16.mxu0 0
    %917 = vmatpush1.bf16.msra.mxu0 %v885
    %918 = vmatprep.subr.bf16.mxu0 0
    %919 = vmatpush1.bf16.msra.mxu0 %v884
    %920 = vmatprep.subr.bf16.mxu0 0
    %921 = vmatpush1.bf16.msra.mxu0 %v883
    %922 = vmatprep.subr.bf16.mxu0 0
    %923 = vmatpush1.bf16.msra.mxu0 %v882
    %924 = vmatprep.subr.bf16.mxu0 0
    %925 = vmatpush1.bf16.msra.mxu0 %v881
    %926 = vmatprep.subr.bf16.mxu0 0
    %927 = vmatpush1.bf16.msra.mxu0 %v880
    %928 = vmatprep.subr.bf16.mxu0 0
    %929 = vmatpush2.bf16.msra.mxu0 %v895
    %930 = vmatprep.subr.bf16.mxu0 0
    %931 = vmatpush2.bf16.msra.mxu0 %v894
    %932 = vmatprep.subr.bf16.mxu0 0
    %933 = vmatpush2.bf16.msra.mxu0 %v893
    %934 = vmatprep.subr.bf16.mxu0 0
    %935 = vmatpush2.bf16.msra.mxu0 %v892
    %936 = vmatprep.subr.bf16.mxu0 0
    %937 = vmatpush2.bf16.msra.mxu0 %v891
    %938 = vmatprep.subr.bf16.mxu0 0
    %939 = vmatpush2.bf16.msra.mxu0 %v890
    %940 = vmatprep.subr.bf16.mxu0 0
    %941 = vmatpush2.bf16.msra.mxu0 %v889
    %942 = vmatprep.subr.bf16.mxu0 0
    %943 = vmatpush2.bf16.msra.mxu0 %v888
    %944 = vmatprep.mubr.bf16.mxu0 %v783
    %945 = vmatmul.mubr.bf16.gmra.mxu0 %v782
    %v946 = vpop.f32.mrf.mxu0
    %v947 = vadd.f32 0.0, %v946
    %v948 = vpop.f32.mrf.mxu0
    %v949 = vpop.f32.mrf.mxu0
    %v950 = vadd.f32 0.0, %v949
    %v951 = vpop.f32.mrf.mxu0
    %952 = vdwg.mxu0
    %v985 = vunpack.c.l.b16 %v499
    %v986 = vunpack.c.l.b16 %v500
    %v987 = vunpack.c.l.b16 %v501
    %v988 = vunpack.c.l.b16 %v502
    %v989 = vunpack.c.l.b16 %v503
    %v990 = vunpack.c.l.b16 %v504
    %v991 = vunpack.c.l.b16 %v505
    %v992 = vunpack.c.l.b16 %v506
    %v993 = vunpack.c.l.b16 %v507
    %v994 = vunpack.c.l.b16 %v508
    %v995 = vunpack.c.l.b16 %v509
    %v996 = vunpack.c.l.b16 %v510
    %v997 = vunpack.c.l.b16 %v511
    %v998 = vunpack.c.l.b16 %v512
    %v999 = vunpack.c.l.b16 %v513
    %v1000 = vunpack.c.l.b16 %v514
    %v1001 = vunpack.c.l.b16 %v515
    %v1002 = vunpack.c.l.b16 %v516
    %v1003 = vunpack.c.l.b16 %v517
    %v1004 = vunpack.c.l.b16 %v518
    %v1005 = vunpack.c.l.b16 %v519
    %v1006 = vunpack.c.l.b16 %v520
    %v1007 = vunpack.c.l.b16 %v521
    %v1008 = vunpack.c.l.b16 %v522
    %v1009 = vunpack.c.l.b16 %v523
    %v1010 = vunpack.c.l.b16 %v524
    %v1011 = vunpack.c.l.b16 %v525
    %v1012 = vunpack.c.l.b16 %v526
    %v1013 = vunpack.c.l.b16 %v527
    %v1014 = vunpack.c.l.b16 %v528
    %v1015 = vunpack.c.l.b16 %v529
    %v1016 = vunpack.c.l.b16 %v530
    %v1017 = vpack.c.b16 %v986, %v985
    %v1018 = vpack.c.b16 %v988, %v987
    %v1019 = vpack.c.b16 %v990, %v989
    %v1020 = vpack.c.b16 %v992, %v991
    %v1021 = vpack.c.b16 %v994, %v993
    %v1022 = vpack.c.b16 %v996, %v995
    %v1023 = vpack.c.b16 %v998, %v997
    %v1024 = vpack.c.b16 %v1000, %v999
    %v1025 = vpack.c.b16 %v1002, %v1001
    %v1026 = vpack.c.b16 %v1004, %v1003
    %v1027 = vpack.c.b16 %v1006, %v1005
    %v1028 = vpack.c.b16 %v1008, %v1007
    %v1029 = vpack.c.b16 %v1010, %v1009
    %v1030 = vpack.c.b16 %v1012, %v1011
    %v1031 = vpack.c.b16 %v1014, %v1013
    %v1032 = vpack.c.b16 %v1016, %v1015
    %1049 = vmatprep.subr.bf16.mxu0 0
    %1050 = vmatpush1.bf16.msra.mxu0 %v1024
    %1051 = vmatprep.subr.bf16.mxu0 0
    %1052 = vmatpush1.bf16.msra.mxu0 %v1023
    %1053 = vmatprep.subr.bf16.mxu0 0
    %1054 = vmatpush1.bf16.msra.mxu0 %v1022
    %1055 = vmatprep.subr.bf16.mxu0 0
    %1056 = vmatpush1.bf16.msra.mxu0 %v1021
    %1057 = vmatprep.subr.bf16.mxu0 0
    %1058 = vmatpush1.bf16.msra.mxu0 %v1020
    %1059 = vmatprep.subr.bf16.mxu0 0
    %1060 = vmatpush1.bf16.msra.mxu0 %v1019
    %1061 = vmatprep.subr.bf16.mxu0 0
    %1062 = vmatpush1.bf16.msra.mxu0 %v1018
    %1063 = vmatprep.subr.bf16.mxu0 0
    %1064 = vmatpush1.bf16.msra.mxu0 %v1017
    %1065 = vmatprep.subr.bf16.mxu0 0
    %1066 = vmatpush2.bf16.msra.mxu0 %v1032
    %1067 = vmatprep.subr.bf16.mxu0 0
    %1068 = vmatpush2.bf16.msra.mxu0 %v1031
    %1069 = vmatprep.subr.bf16.mxu0 0
    %1070 = vmatpush2.bf16.msra.mxu0 %v1030
    %1071 = vmatprep.subr.bf16.mxu0 0
    %1072 = vmatpush2.bf16.msra.mxu0 %v1029
    %1073 = vmatprep.subr.bf16.mxu0 0
    %1074 = vmatpush2.bf16.msra.mxu0 %v1028
    %1075 = vmatprep.subr.bf16.mxu0 0
    %1076 = vmatpush2.bf16.msra.mxu0 %v1027
    %1077 = vmatprep.subr.bf16.mxu0 0
    %1078 = vmatpush2.bf16.msra.mxu0 %v1026
    %1079 = vmatprep.subr.bf16.mxu0 0
    %1080 = vmatpush2.bf16.msra.mxu0 %v1025
    %1081 = vmatprep.mubr.bf16.mxu0 %v498
    %1082 = vmatmul.mubr.bf16.gmra.mxu0 %v497
    %v1083 = vpop.f32.mrf.mxu0
    %v1084 = vadd.f32 %v947, %v1083
    %v1085 = vpop.f32.mrf.mxu0
    %v1086 = vpop.f32.mrf.mxu0
    %v1087 = vadd.f32 %v950, %v1086
    %v1088 = vpop.f32.mrf.mxu0
    %1089 = vdwg.mxu0
    %v1090 = vld [vmem:[%s8] sm:$0x1]
    %v1092 = vlaneseq
    %v1093 = vshrl.u32 %v1092, 7
    %v1094 = vsub.s32 0, %v1093
    %v1095 = vrot.slane %v1090, %v1094
    %v1097 = vadd.f32 %v1084, %v1095
    %v1098 = vadd.f32 %v1087, %v1095
    %v1099 = vpack.c.bf16 %v1098, %v1097
    %v1101 = vunpack.c.l.b16 %v1099
    %v1102 = vunpack.c.h.b16 %v1099
    %v1103 = vpack.c.b16 %v1101, %v1101
    %v1104 = vpack.c.b16 %v1102, %v1102
    %1107 = vst [vmem:[#allocation10] sm:$0xf] %v1103
    %1108 = vst [vmem:[#allocation10 + $0x4] sm:$0xf] %v1104
    // Predicated region
    $region54: #{tpu_custom_call.1} parent=1 // pred_check
      _
    $region55: #{tpu_custom_call.1} parent=1 // pred_check_branch
      %1110 = sbr.rel (0) target = $region57
    $region56: #{tpu_custom_call.1} parent=1 // pred_region
      %s1112 = ssub.s32 128, 128
      %1113 = vsyncadd [#allocation4], %s1112
      %s1114 = sshll.u32 [#allocation10], 4
      %s1115 = int_to_ptr.vmem [resolvable:$true] %s1114
      %1120 = dma.vmem_to_hbm [thread:$0]  %s1115, 128, %s9, [#allocation4], 64, 64, 4
    $region57: #{tpu_custom_call.1} parent=1 // pred_fallthru
      _
    // Predicated region
    $region58: #{tpu_custom_call.1} parent=1 // pred_check
      _
    $region59: #{tpu_custom_call.1} parent=1 // pred_check_branch
      %1122 = sbr.rel (0) target = $region61
    $region60: #{tpu_custom_call.1} parent=1 // pred_region
      %1123 = dma.done [#allocation4], 128
    $region61: #{tpu_custom_call.1} parent=1 // pred_fallthru
      _
    %1124 = vsyncpa [#allocation3], 1
    %1125 = vsyncpa [#allocation6], 1
    %1126 = vsyncpa [#allocation9], 1
    %1127 = vsyncpa [#allocation4], 1

</llo_original>
